<compile_context>
chip_gen: v7x
topology: tpu7x:2x2x1
jax: 0.10.0
libtpu: 0.0.40
codegen_flags: <defaults>
</compile_context>

<pallas_src>
import jax
import jax.numpy as jnp
from jax.experimental import pallas as pl
from jax.experimental.pallas import tpu as pltpu

X_SIZE = 8          # data.x_size
Z_SIZE = 4          # data.z_size
H1, H2, H3 = 16, 32, 64
BN_EPS = 1e-5
LEAKY_SLOPE = 0.01  # nn.LeakyReLU default

MB = 8                       # rows per BatchNorm minibatch (= one grid step)
DATA_W = X_SIZE + Z_SIZE     # packed [x | eps] lanes = 12
OUT_W = 128                  # lane-dense packed output [z | mu | sigma | zeros]

# Fused (two-branch) layer widths.
F1, F2, F3, F4 = 2 * H1, 2 * H2, 2 * H3, 2 * Z_SIZE

# Static row offsets of each fused weight inside the packed (W_ROWS, 128) buffer.
W1_OFF = 0
W2_OFF = W1_OFF + X_SIZE     # 8
W3_OFF = W2_OFF + F1         # 40
W4_OFF = W3_OFF + F2         # 104
W_ROWS = W4_OFF + F3         # 232  (multiple of 8)


def encoder_kernel(data_ref, w_ref, p_ref, out_ref):
    d = data_ref[...]                         # (MB, 12) f32 : [x | eps]
    x = d[:, :X_SIZE]                         # (MB, 8)
    eps = d[:, X_SIZE:X_SIZE + Z_SIZE]        # (MB, 4)

    p = p_ref[...]                            # (8, 128) : BN params + final bias
    g1, be1 = p[0:1, :F1], p[1:2, :F1]
    g2, be2 = p[2:3, :F2], p[3:4, :F2]
    g3, be3 = p[4:5, :F3], p[5:6, :F3]
    b4 = p[6:7, :F4]

    inv_n = 1.0 / d.shape[0]

    def bn_lrelu(h, gamma, beta):
        # BatchNorm1d training mode (batch stats, biased variance), one pass.
        mean = jnp.sum(h, axis=0, keepdims=True) * inv_n
        var = jnp.sum(h * h, axis=0, keepdims=True) * inv_n - mean * mean
        hn = (h - mean) * jax.lax.rsqrt(var + BN_EPS) * gamma + beta
        # LeakyReLU as a single max (slope < 1).
        return jnp.maximum(hn, LEAKY_SLOPE * hn)

    # Fused (block-diagonal) matmul chain: both branches in one pass per layer.
    # Weight slices are static windows into the resident VMEM weight buffer.
    h = jnp.dot(x, w_ref[W1_OFF:W1_OFF + X_SIZE, :F1],
                preferred_element_type=jnp.float32)               # (MB, 32)
    h = bn_lrelu(h, g1, be1)
    h = jnp.dot(h, w_ref[W2_OFF:W2_OFF + F1, :F2],
                preferred_element_type=jnp.float32)               # (MB, 64)
    h = bn_lrelu(h, g2, be2)
    h = jnp.dot(h, w_ref[W3_OFF:W3_OFF + F2, :F3],
                preferred_element_type=jnp.float32)               # (MB, 128)
    h = bn_lrelu(h, g3, be3)
    h = jnp.dot(h, w_ref[W4_OFF:W4_OFF + F3, :F4],
                preferred_element_type=jnp.float32) + b4          # (MB, 8)

    mu = h[:, :Z_SIZE]
    log_variance = h[:, Z_SIZE:]
    sigma = jnp.exp(0.5 * log_variance)
    z = eps * sigma + mu

    # Single lane-dense store: [z | mu | sigma | zeros] -> (MB, 128)
    pad = jnp.zeros((d.shape[0], OUT_W - 3 * Z_SIZE), jnp.float32)
    out_ref[...] = jnp.concatenate([z, mu, sigma, pad], axis=-1)


def encoder_forward(x, eps, wbuf, pbuf):
    """x: (N, 8, X_SIZE), eps: (N, 8, Z_SIZE).

    Processes N independent 8-row minibatches in one pallas_call; each minibatch
    gets its own BatchNorm batch statistics (same as calling the PyTorch module
    once per minibatch)."""
    N = x.shape[0]
    assert x.shape == (N, MB, X_SIZE) and eps.shape == (N, MB, Z_SIZE)

    data = jnp.concatenate([x, eps], axis=-1).reshape(N * MB, DATA_W)
    data = data.astype(jnp.float32)

    out = pl.pallas_call(
        encoder_kernel,
        out_shape=jax.ShapeDtypeStruct((N * MB, OUT_W), jnp.float32),
        grid=(N,),
        in_specs=[
            pl.BlockSpec((MB, DATA_W), lambda n: (n, 0)),    # per-step minibatch
            pl.BlockSpec((W_ROWS, 128), lambda n: (0, 0)),   # weights: DMA'd once, resident
            pl.BlockSpec((8, 128), lambda n: (0, 0)),        # BN params/bias: resident
        ],
        out_specs=pl.BlockSpec((MB, OUT_W), lambda n: (n, 0)),
        compiler_params=pltpu.CompilerParams(
            dimension_semantics=("parallel",),               # shard minibatches across TCs (v7x)
        ),
    )(data, wbuf, pbuf)

    z = out[:, 0:Z_SIZE].reshape(N, MB, Z_SIZE)
    mu = out[:, Z_SIZE:2 * Z_SIZE].reshape(N, MB, Z_SIZE)
    sigma = out[:, 2 * Z_SIZE:3 * Z_SIZE].reshape(N, MB, Z_SIZE)
    return z, mu, sigma


def init_branch_params(key):
    """Deterministic synthetic init; shapes match the PyTorch module.
    Linear weights stored pre-transposed as [branch, in, out]."""
    ks = jax.random.split(key, 5)

    def w(k, shape):
        return 0.1 * jax.random.normal(k, shape, jnp.float32)

    w1 = w(ks[0], (2, X_SIZE, H1))          # Linear(x_size,16, bias=False)
    w2 = w(ks[1], (2, H1, H2))              # Linear(16,32, bias=False)
    w3 = w(ks[2], (2, H2, H3))              # Linear(32,64, bias=False)
    w4 = w(ks[3], (2, H3, Z_SIZE))          # Linear(64, z_size)  (has bias)
    b4 = 0.1 * jax.random.normal(ks[4], (2, 1, Z_SIZE), jnp.float32)

    # BatchNorm affine params (gamma=1, beta=0, PyTorch default init).
    g1, be1 = jnp.ones((2, 1, H1), jnp.float32), jnp.zeros((2, 1, H1), jnp.float32)
    g2, be2 = jnp.ones((2, 1, H2), jnp.float32), jnp.zeros((2, 1, H2), jnp.float32)
    g3, be3 = jnp.ones((2, 1, H3), jnp.float32), jnp.zeros((2, 1, H3), jnp.float32)

    return (w1, w2, w3, w4, b4, g1, be1, g2, be2, g3, be3)


def pack_params(per_branch):
    """Fuse the two branches (W1 concat along out axis, W2/W3/W4 block-diagonal)
    and pack everything into two lane-padded VMEM-resident buffers:
        wbuf: (W_ROWS, 128)  rows [W1 | W2 | W3 | W4]
        pbuf: (8, 128)       rows [g1, b1, g2, b2, g3, b3, bias4, 0]"""
    w1, w2, w3, w4, b4, g1, be1, g2, be2, g3, be3 = per_branch

    def blockdiag(w):                        # (2, in, out) -> (2*in, 2*out)
        i, o = w.shape[1], w.shape[2]
        zero = jnp.zeros((i, o), w.dtype)
        top = jnp.concatenate([w[0], zero], axis=1)
        bot = jnp.concatenate([zero, w[1]], axis=1)
        return jnp.concatenate([top, bot], axis=0)

    def pad_lanes(m):                        # pad last dim to 128 lanes
        return jnp.pad(m, ((0, 0), (0, 128 - m.shape[1])))

    W1 = jnp.concatenate([w1[0], w1[1]], axis=1)      # (X_SIZE, F1)
    W2 = blockdiag(w2)                                # (F1, F2)
    W3 = blockdiag(w3)                                # (F2, F3)
    W4 = blockdiag(w4)                                # (F3, F4)
    wbuf = jnp.concatenate(
        [pad_lanes(W1), pad_lanes(W2), pad_lanes(W3), pad_lanes(W4)], axis=0)
    assert wbuf.shape == (W_ROWS, 128)

    def row(v):                              # (2, 1, F) -> (1, 128)
        r = jnp.concatenate([v[0], v[1]], axis=1)
        return jnp.pad(r, ((0, 0), (0, 128 - r.shape[1])))

    pbuf = jnp.concatenate(
        [row(g1), row(be1), row(g2), row(be2), row(g3), row(be3), row(b4),
         jnp.zeros((1, 128), jnp.float32)], axis=0)
    assert pbuf.shape == (8, 128)
    return wbuf, pbuf


if __name__ == "__main__":
    key = jax.random.PRNGKey(0)
    kx, keps, kp = jax.random.split(key, 3)

    N = 4                                    # independent 8-row minibatches per call
    x = jax.random.normal(kx, (N, MB, X_SIZE), jnp.float32)
    # epsilon = torch.randn_like(mu) -> generated here and fed in for determinism
    eps = jax.random.normal(keps, (N, MB, Z_SIZE), jnp.float32)

    branch_params = init_branch_params(kp)
    wbuf, pbuf = pack_params(branch_params)

    fwd = jax.jit(encoder_forward)
    z, mu, sigma = fwd(x, eps, wbuf, pbuf)
    jax.block_until_ready((z, mu, sigma))

    assert z.shape == (N, MB, Z_SIZE)
    assert mu.shape == (N, MB, Z_SIZE)
    assert sigma.shape == (N, MB, Z_SIZE)
    assert bool(jnp.all(jnp.isfinite(z))) and bool(jnp.all(jnp.isfinite(sigma)))
    print("KERNEL_OK")
</pallas_src>

<mosaic_0001>
module attributes {stable_mosaic.version = 11 : i64} {
  func.func @encoder_kernel(%arg0: i32, %arg1: memref<8x12xf32, #tpu.memory_space<vmem>>, %arg2: memref<232x128xf32, #tpu.memory_space<vmem>>, %arg3: memref<8x128xf32, #tpu.memory_space<vmem>>, %arg4: memref<8x128xf32, #tpu.memory_space<vmem>>) attributes {dimension_semantics = [#tpu.dimension_semantics<parallel>], iteration_bounds = array<i64: 4>, scalar_prefetch = 0 : i64, scratch_operands = 0 : i64, tpu.core_type = #tpu.core_type<tc>, window_params = [{transform_indices = @transform_0, window_bounds = array<i64: 8, 12>}, {pipeline_mode = #tpu.pipeline_mode<synchronous>, transform_indices = @transform_1, window_bounds = array<i64: 232, 128>}, {pipeline_mode = #tpu.pipeline_mode<synchronous>, transform_indices = @transform_2, window_bounds = array<i64: 8, 128>}, {transform_indices = @transform_3, window_bounds = array<i64: 8, 128>}]} {
    %c0 = arith.constant 0 : index
    %c0_0 = arith.constant 0 : index
    %0 = vector.load %arg1[%c0, %c0_0] : memref<8x12xf32, #tpu.memory_space<vmem>>, vector<8x12xf32>
    %1 = vector.extract_strided_slice %0 {offsets = [0, 0], sizes = [8, 8], strides = [1, 1]} : vector<8x12xf32> to vector<8x8xf32>
    %2 = vector.extract_strided_slice %0 {offsets = [0, 8], sizes = [8, 4], strides = [1, 1]} : vector<8x12xf32> to vector<8x4xf32>
    %c0_1 = arith.constant 0 : index
    %c0_2 = arith.constant 0 : index
    %3 = vector.load %arg3[%c0_1, %c0_2] : memref<8x128xf32, #tpu.memory_space<vmem>>, vector<8x128xf32>
    %4 = vector.extract_strided_slice %3 {offsets = [0, 0], sizes = [1, 32], strides = [1, 1]} : vector<8x128xf32> to vector<1x32xf32>
    %5 = vector.extract_strided_slice %3 {offsets = [1, 0], sizes = [1, 32], strides = [1, 1]} : vector<8x128xf32> to vector<1x32xf32>
    %6 = vector.extract_strided_slice %3 {offsets = [2, 0], sizes = [1, 64], strides = [1, 1]} : vector<8x128xf32> to vector<1x64xf32>
    %7 = vector.extract_strided_slice %3 {offsets = [3, 0], sizes = [1, 64], strides = [1, 1]} : vector<8x128xf32> to vector<1x64xf32>
    %8 = vector.extract_strided_slice %3 {offsets = [4, 0], sizes = [1, 128], strides = [1, 1]} : vector<8x128xf32> to vector<1x128xf32>
    %9 = vector.extract_strided_slice %3 {offsets = [5, 0], sizes = [1, 128], strides = [1, 1]} : vector<8x128xf32> to vector<1x128xf32>
    %10 = vector.extract_strided_slice %3 {offsets = [6, 0], sizes = [1, 8], strides = [1, 1]} : vector<8x128xf32> to vector<1x8xf32>
    %c0_3 = arith.constant 0 : index
    %c0_4 = arith.constant 0 : index
    %11 = vector.load %arg2[%c0_3, %c0_4] : memref<232x128xf32, #tpu.memory_space<vmem>>, vector<8x32xf32>
    %cst = arith.constant dense<0.000000e+00> : vector<8x32xf32>
    %12 = tpu.matmul %1, %11, %cst {dimension_numbers = #tpu.dot_dimension_numbers<[1], [0], [0], [1], [0, 0, 1, 1], [], []>} : vector<8x8xf32>, vector<8x32xf32>, vector<8x32xf32> -> vector<8x32xf32>
    %cst_5 = arith.constant dense<0.000000e+00> : vector<32xf32>
    %13 = vector.multi_reduction <add>, %12, %cst_5 [0] : vector<8x32xf32> to vector<32xf32>
    %14 = vector.shape_cast %13 : vector<32xf32> to vector<1x32xf32>
    %cst_6 = arith.constant 1.250000e-01 : f32
    %15 = vector.broadcast %cst_6 : f32 to vector<1x32xf32>
    %16 = arith.mulf %14, %15 : vector<1x32xf32>
    %17 = arith.mulf %12, %12 : vector<8x32xf32>
    %cst_7 = arith.constant dense<0.000000e+00> : vector<32xf32>
    %18 = vector.multi_reduction <add>, %17, %cst_7 [0] : vector<8x32xf32> to vector<32xf32>
    %19 = vector.shape_cast %18 : vector<32xf32> to vector<1x32xf32>
    %cst_8 = arith.constant 1.250000e-01 : f32
    %20 = vector.broadcast %cst_8 : f32 to vector<1x32xf32>
    %21 = arith.mulf %19, %20 : vector<1x32xf32>
    %22 = arith.mulf %16, %16 : vector<1x32xf32>
    %23 = arith.subf %21, %22 : vector<1x32xf32>
    %24 = vector.broadcast %16 : vector<1x32xf32> to vector<8x32xf32>
    %25 = arith.subf %12, %24 : vector<8x32xf32>
    %cst_9 = arith.constant 9.99999974E-6 : f32
    %26 = vector.broadcast %cst_9 : f32 to vector<1x32xf32>
    %27 = arith.addf %23, %26 : vector<1x32xf32>
    %28 = math.rsqrt %27 : vector<1x32xf32>
    %29 = vector.broadcast %28 : vector<1x32xf32> to vector<8x32xf32>
    %30 = arith.mulf %25, %29 : vector<8x32xf32>
    %31 = vector.broadcast %4 : vector<1x32xf32> to vector<8x32xf32>
    %32 = arith.mulf %30, %31 : vector<8x32xf32>
    %33 = vector.broadcast %5 : vector<1x32xf32> to vector<8x32xf32>
    %34 = arith.addf %32, %33 : vector<8x32xf32>
    %cst_10 = arith.constant 0.00999999977 : f32
    %35 = vector.broadcast %cst_10 : f32 to vector<8x32xf32>
    %36 = arith.mulf %35, %34 : vector<8x32xf32>
    %37 = arith.maximumf %34, %36 : vector<8x32xf32>
    %c8 = arith.constant 8 : index
    %c0_11 = arith.constant 0 : index
    %38 = vector.load %arg2[%c8, %c0_11] : memref<232x128xf32, #tpu.memory_space<vmem>>, vector<32x64xf32>
    %cst_12 = arith.constant dense<0.000000e+00> : vector<8x64xf32>
    %39 = tpu.matmul %37, %38, %cst_12 {dimension_numbers = #tpu.dot_dimension_numbers<[1], [0], [0], [1], [0, 0, 1, 1], [], []>} : vector<8x32xf32>, vector<32x64xf32>, vector<8x64xf32> -> vector<8x64xf32>
    %cst_13 = arith.constant dense<0.000000e+00> : vector<64xf32>
    %40 = vector.multi_reduction <add>, %39, %cst_13 [0] : vector<8x64xf32> to vector<64xf32>
    %41 = vector.shape_cast %40 : vector<64xf32> to vector<1x64xf32>
    %cst_14 = arith.constant 1.250000e-01 : f32
    %42 = vector.broadcast %cst_14 : f32 to vector<1x64xf32>
    %43 = arith.mulf %41, %42 : vector<1x64xf32>
    %44 = arith.mulf %39, %39 : vector<8x64xf32>
    %cst_15 = arith.constant dense<0.000000e+00> : vector<64xf32>
    %45 = vector.multi_reduction <add>, %44, %cst_15 [0] : vector<8x64xf32> to vector<64xf32>
    %46 = vector.shape_cast %45 : vector<64xf32> to vector<1x64xf32>
    %cst_16 = arith.constant 1.250000e-01 : f32
    %47 = vector.broadcast %cst_16 : f32 to vector<1x64xf32>
    %48 = arith.mulf %46, %47 : vector<1x64xf32>
    %49 = arith.mulf %43, %43 : vector<1x64xf32>
    %50 = arith.subf %48, %49 : vector<1x64xf32>
    %51 = vector.broadcast %43 : vector<1x64xf32> to vector<8x64xf32>
    %52 = arith.subf %39, %51 : vector<8x64xf32>
    %cst_17 = arith.constant 9.99999974E-6 : f32
    %53 = vector.broadcast %cst_17 : f32 to vector<1x64xf32>
    %54 = arith.addf %50, %53 : vector<1x64xf32>
    %55 = math.rsqrt %54 : vector<1x64xf32>
    %56 = vector.broadcast %55 : vector<1x64xf32> to vector<8x64xf32>
    %57 = arith.mulf %52, %56 : vector<8x64xf32>
    %58 = vector.broadcast %6 : vector<1x64xf32> to vector<8x64xf32>
    %59 = arith.mulf %57, %58 : vector<8x64xf32>
    %60 = vector.broadcast %7 : vector<1x64xf32> to vector<8x64xf32>
    %61 = arith.addf %59, %60 : vector<8x64xf32>
    %cst_18 = arith.constant 0.00999999977 : f32
    %62 = vector.broadcast %cst_18 : f32 to vector<8x64xf32>
    %63 = arith.mulf %62, %61 : vector<8x64xf32>
    %64 = arith.maximumf %61, %63 : vector<8x64xf32>
    %c40 = arith.constant 40 : index
    %c0_19 = arith.constant 0 : index
    %65 = vector.load %arg2[%c40, %c0_19] : memref<232x128xf32, #tpu.memory_space<vmem>>, vector<64x128xf32>
    %cst_20 = arith.constant dense<0.000000e+00> : vector<8x128xf32>
    %66 = tpu.matmul %64, %65, %cst_20 {dimension_numbers = #tpu.dot_dimension_numbers<[1], [0], [0], [1], [0, 0, 1, 1], [], []>} : vector<8x64xf32>, vector<64x128xf32>, vector<8x128xf32> -> vector<8x128xf32>
    %cst_21 = arith.constant dense<0.000000e+00> : vector<128xf32>
    %67 = vector.multi_reduction <add>, %66, %cst_21 [0] : vector<8x128xf32> to vector<128xf32>
    %68 = vector.shape_cast %67 : vector<128xf32> to vector<1x128xf32>
    %cst_22 = arith.constant 1.250000e-01 : f32
    %69 = vector.broadcast %cst_22 : f32 to vector<1x128xf32>
    %70 = arith.mulf %68, %69 : vector<1x128xf32>
    %71 = arith.mulf %66, %66 : vector<8x128xf32>
    %cst_23 = arith.constant dense<0.000000e+00> : vector<128xf32>
    %72 = vector.multi_reduction <add>, %71, %cst_23 [0] : vector<8x128xf32> to vector<128xf32>
    %73 = vector.shape_cast %72 : vector<128xf32> to vector<1x128xf32>
    %cst_24 = arith.constant 1.250000e-01 : f32
    %74 = vector.broadcast %cst_24 : f32 to vector<1x128xf32>
    %75 = arith.mulf %73, %74 : vector<1x128xf32>
    %76 = arith.mulf %70, %70 : vector<1x128xf32>
    %77 = arith.subf %75, %76 : vector<1x128xf32>
    %78 = vector.broadcast %70 : vector<1x128xf32> to vector<8x128xf32>
    %79 = arith.subf %66, %78 : vector<8x128xf32>
    %cst_25 = arith.constant 9.99999974E-6 : f32
    %80 = vector.broadcast %cst_25 : f32 to vector<1x128xf32>
    %81 = arith.addf %77, %80 : vector<1x128xf32>
    %82 = math.rsqrt %81 : vector<1x128xf32>
    %83 = vector.broadcast %82 : vector<1x128xf32> to vector<8x128xf32>
    %84 = arith.mulf %79, %83 : vector<8x128xf32>
    %85 = vector.broadcast %8 : vector<1x128xf32> to vector<8x128xf32>
    %86 = arith.mulf %84, %85 : vector<8x128xf32>
    %87 = vector.broadcast %9 : vector<1x128xf32> to vector<8x128xf32>
    %88 = arith.addf %86, %87 : vector<8x128xf32>
    %cst_26 = arith.constant 0.00999999977 : f32
    %89 = vector.broadcast %cst_26 : f32 to vector<8x128xf32>
    %90 = arith.mulf %89, %88 : vector<8x128xf32>
    %91 = arith.maximumf %88, %90 : vector<8x128xf32>
    %c104 = arith.constant 104 : index
    %c0_27 = arith.constant 0 : index
    %92 = vector.load %arg2[%c104, %c0_27] : memref<232x128xf32, #tpu.memory_space<vmem>>, vector<128x8xf32>
    %cst_28 = arith.constant dense<0.000000e+00> : vector<8x8xf32>
    %93 = tpu.matmul %91, %92, %cst_28 {dimension_numbers = #tpu.dot_dimension_numbers<[1], [0], [0], [1], [0, 0, 1, 1], [], []>} : vector<8x128xf32>, vector<128x8xf32>, vector<8x8xf32> -> vector<8x8xf32>
    %94 = vector.broadcast %10 : vector<1x8xf32> to vector<8x8xf32>
    %95 = arith.addf %93, %94 : vector<8x8xf32>
    %96 = vector.extract_strided_slice %95 {offsets = [0, 0], sizes = [8, 4], strides = [1, 1]} : vector<8x8xf32> to vector<8x4xf32>
    %97 = vector.extract_strided_slice %95 {offsets = [0, 4], sizes = [8, 4], strides = [1, 1]} : vector<8x8xf32> to vector<8x4xf32>
    %cst_29 = arith.constant 5.000000e-01 : f32
    %98 = vector.broadcast %cst_29 : f32 to vector<8x4xf32>
    %99 = arith.mulf %98, %97 : vector<8x4xf32>
    %100 = math.exp %99 : vector<8x4xf32>
    %101 = arith.mulf %2, %100 : vector<8x4xf32>
    %102 = arith.addf %101, %96 : vector<8x4xf32>
    %cst_30 = arith.constant 0.000000e+00 : f32
    %103 = vector.broadcast %cst_30 : f32 to vector<8x116xf32>
    %104 = tpu.concatenate %102, %96, %100, %103 in 1 : vector<8x4xf32>, vector<8x4xf32>, vector<8x4xf32>, vector<8x116xf32> -> vector<8x128xf32>
    %c0_31 = arith.constant 0 : index
    %c0_32 = arith.constant 0 : index
    %105 = vector.load %arg4[%c0_31, %c0_32] : memref<8x128xf32, #tpu.memory_space<vmem>>, vector<8x128xf32>
    tpu.vector_store %arg4[%c0_31, %c0_32], %104 {strides = array<i32>} : memref<8x128xf32, #tpu.memory_space<vmem>>, vector<8x128xf32>,
    return
  }
  func.func @transform_0(%arg0: i32) -> (i32, i32) {
    %c0_i32 = arith.constant 0 : i32
    %c0_i32_0 = arith.constant 0 : i32
    return %arg0, %c0_i32 : i32, i32
  }
  func.func @transform_1(%arg0: i32) -> (i32, i32) {
    %c0_i32 = arith.constant 0 : i32
    %c0_i32_0 = arith.constant 0 : i32
    %c0_i32_1 = arith.constant 0 : i32
    return %c0_i32, %c0_i32_0 : i32, i32
  }
  func.func @transform_2(%arg0: i32) -> (i32, i32) {
    %c0_i32 = arith.constant 0 : i32
    %c0_i32_0 = arith.constant 0 : i32
    %c0_i32_1 = arith.constant 0 : i32
    return %c0_i32, %c0_i32_0 : i32, i32
  }
  func.func @transform_3(%arg0: i32) -> (i32, i32) {
    %c0_i32 = arith.constant 0 : i32
    %c0_i32_0 = arith.constant 0 : i32
    return %arg0, %c0_i32 : i32, i32
  }
}

</mosaic_0001>

<llo_original>
// kernel: encoder_forward.1
$region0: #{encoder_forward.1}
  #allocation0 [shape = 'u32[]', space=smem, size = 0x4, offset = 0x4, fixed_abs, tag = 'smem constant byte address 0x4 - core index']
  #allocation1 [shape = 'u32[144,128]{1,0:T(1,128)}', space=vmem, size = 0x12000, scoped, tag = 'internal scratch']
  %s0 = inlined_call_operand.vmem [shape: f32[32,12], index: 0, kind: input, shape index: {}]
  %s1 = inlined_call_operand.hbm [shape: f32[232,128], index: 1, kind: input, shape index: {}]
  %s2 = inlined_call_operand.vmem [shape: f32[8,128], index: 2, kind: input, shape index: {}]
  %s3 = inlined_call_operand.vmem [shape: f32[32,128], index: 3, kind: output, shape index: {}]
  %s4 = sld [smem:[#allocation0]]
  $region49: #{encoder_forward.1} parent=0
    _
  %s6 = ssub.s32 1, %s4
  %s7 = scalar_select 0, %s6, %s4
  $region1: #{encoder_forward.1} parent=0
    #allocation2 [shape = 'u8[118784]{0}', space=vmem, size = 0x1d000, scoped, tag = 'input window, operand 1, single buffered']
    #allocation3 [shape = 's32[2]{0}', space=sflag, size = 0x8, scoped, tag = 'scoped memory for encoder_forward.1']
    %8 = vsyncpa [#allocation3], 0
    loop: start=0, step=1, limit=6
    $region2: #{encoder_forward.1} parent=1 // loop_pre_header
      _
    $region3: #{encoder_forward.1} parent=1 // loop_header
      %s10 = sphi 0, %s14
      %p11 = scmp.ge.s32.totalorder %s10, 6
      %s20 = sphi 0, %s22
      %s23 = sphi 0, %s20
      %s24 = sphi 0, %s23
      %s40 = sphi 0, %s24
      %s44 = sphi 0, %s44
      %s46 = sphi 0, %s44
      %s47 = sphi 0, %s46
      %s61 = sphi 0, %s47
      %s65 = sphi 0, %s65
      %s67 = sphi 0, %s65
      %s68 = sphi 0, %s67
      %s82 = sphi 0, %s68
      %s88 = sphi 0, %s90
      %s91 = sphi 0, %s88
      %s92 = sphi 0, %s91
      %s108 = sphi 0, %s92
    $region4: #{encoder_forward.1} parent=1 // loop_header_branch
      %13 = sbr.rel (%p11) target = $region8
    $region5: #{encoder_forward.1} parent=1 // loop_body
      %s15 = ssub.s32 %s10, 1
      %s16 = ssub.s32 %s10, 2
      %s17 = sadd.s32 %s10, 1
      %s18 = ssub.s32 %s10, %s17
      %p19 = scmp.eq.s32.totalorder %s18, 0
      %s21 = sadd.s32 %s20, 1
      %s22 = scalar_select %p19, %s20, %s21
      %p25 = pneg %p19
      %p26 = scmp.eq.s32.totalorder %s10, 3
      %p27 = por %p25, %p26
      %p28 = scmp.ne.s32.totalorder %s20, %s23
      %p29 = scmp.eq.s32.totalorder %s10, 0
      %p30 = por %p28, %p29
      %p31 = scmp.ne.s32.totalorder %s20, %s23
      %p32 = scmp.eq.s32.totalorder %s15, 3
      %p33 = por %p31, %p32
      %p34 = scmp.ne.s32.totalorder %s23, %s24
      %p35 = scmp.eq.s32.totalorder %s15, 0
      %p36 = por %p34, %p35
      %p37 = scmp.ne.s32.totalorder %s23, %s24
      %p38 = scmp.eq.s32.totalorder %s16, 3
      %p39 = por %p37, %p38
      %p41 = scmp.ne.s32.totalorder %s24, %s40
      %p42 = scmp.eq.s32.totalorder %s16, 0
      %p43 = por %p41, %p42
      %s45 = sadd.s32 %s44, 1
      %p48 = scmp.eq.s32.totalorder %s10, 3
      %p49 = scmp.ne.s32.totalorder %s44, %s46
      %p50 = scmp.eq.s32.totalorder %s10, 0
      %p51 = por %p49, %p50
      %p52 = scmp.ne.s32.totalorder %s44, %s46
      %p53 = scmp.eq.s32.totalorder %s15, 3
      %p54 = por %p52, %p53
      %p55 = scmp.ne.s32.totalorder %s46, %s47
      %p56 = scmp.eq.s32.totalorder %s15, 0
      %p57 = por %p55, %p56
      %p58 = scmp.ne.s32.totalorder %s46, %s47
      %p59 = scmp.eq.s32.totalorder %s16, 3
      %p60 = por %p58, %p59
      %p62 = scmp.ne.s32.totalorder %s47, %s61
      %p63 = scmp.eq.s32.totalorder %s16, 0
      %p64 = por %p62, %p63
      %s66 = sadd.s32 %s65, 1
      %p69 = scmp.eq.s32.totalorder %s10, 3
      %p70 = scmp.ne.s32.totalorder %s65, %s67
      %p71 = scmp.eq.s32.totalorder %s10, 0
      %p72 = por %p70, %p71
      %p73 = scmp.ne.s32.totalorder %s65, %s67
      %p74 = scmp.eq.s32.totalorder %s15, 3
      %p75 = por %p73, %p74
      %p76 = scmp.ne.s32.totalorder %s67, %s68
      %p77 = scmp.eq.s32.totalorder %s15, 0
      %p78 = por %p76, %p77
      %p79 = scmp.ne.s32.totalorder %s67, %s68
      %p80 = scmp.eq.s32.totalorder %s16, 3
      %p81 = por %p79, %p80
      %p83 = scmp.ne.s32.totalorder %s68, %s82
      %p84 = scmp.eq.s32.totalorder %s16, 0
      %p85 = por %p83, %p84
      %s86 = ssub.s32 %s10, %s17
      %p87 = scmp.eq.s32.totalorder %s86, 0
      %s89 = sadd.s32 %s88, 1
      %s90 = scalar_select %p87, %s88, %s89
      %p93 = pneg %p87
      %p94 = scmp.eq.s32.totalorder %s10, 3
      %p95 = por %p93, %p94
      %p96 = scmp.ne.s32.totalorder %s88, %s91
      %p97 = scmp.eq.s32.totalorder %s10, 0
      %p98 = por %p96, %p97
      %p99 = scmp.ne.s32.totalorder %s88, %s91
      %p100 = scmp.eq.s32.totalorder %s15, 3
      %p101 = por %p99, %p100
      %p102 = scmp.ne.s32.totalorder %s91, %s92
      %p103 = scmp.eq.s32.totalorder %s15, 0
      %p104 = por %p102, %p103
      %p105 = scmp.ne.s32.totalorder %s91, %s92
      %p106 = scmp.eq.s32.totalorder %s16, 3
      %p107 = por %p105, %p106
      %p109 = scmp.ne.s32.totalorder %s92, %s108
      %p110 = scmp.eq.s32.totalorder %s16, 0
      %p111 = por %p109, %p110
      %p112 = scmp.le.s32.totalorder 1, %s10
      %p113 = scmp.lt.s32.totalorder %s10, 5
      %p114 = pnand %p112, %p113
      %p115 = pneg %p114
      // Predicated region
      $region9: #{encoder_forward.1} parent=5 // pred_check
        _
      $region10: #{encoder_forward.1} parent=5 // pred_check_branch
        %117 = sbr.rel (%p114) target = $region12
      $region11: #{encoder_forward.1} parent=5 // pred_region
        %s118 = ssub.s32 %s10, 1
        // Predicated region
        $region13: #{encoder_forward.1} parent=11 // pred_check
          %p119 = pneg %p57
        $region14: #{encoder_forward.1} parent=11 // pred_check_branch
          %121 = sbr.rel (%p119) target = $region16
        $region15: #{encoder_forward.1} parent=11 // pred_region
          %s123 = ssub.s32 3712, 3712
          %124 = vsyncadd [#allocation3], %s123
          %s125 = sshll.u32 [#allocation2], 4
          %s126 = int_to_ptr.vmem [resolvable:$true] %s125
          %131 = dma.hbm_to_vmem [thread:$0]  %s1, 3712, %s126, [#allocation3], 128, 128, 8
        $region16: #{encoder_forward.1} parent=11 // pred_fallthru
          _
        // Predicated region
        $region17: #{encoder_forward.1} parent=11 // pred_check
          %p132 = pneg %p78
        $region18: #{encoder_forward.1} parent=11 // pred_check_branch
          %134 = sbr.rel (%p132) target = $region20
        $region19: #{encoder_forward.1} parent=11 // pred_region
          _
        $region20: #{encoder_forward.1} parent=11 // pred_fallthru
          _
      $region12: #{encoder_forward.1} parent=5 // pred_fallthru
        _
      %p135 = scmp.lt.s32.totalorder %s10, 4
      // Predicated region
      $region21: #{encoder_forward.1} parent=5 // pred_check
        %p136 = pneg %p135
      $region22: #{encoder_forward.1} parent=5 // pred_check_branch
        %138 = sbr.rel (%p136) target = $region24
      $region23: #{encoder_forward.1} parent=5 // pred_region
        // Predicated region
        $region25: #{encoder_forward.1} parent=23 // pred_check
          %p139 = pneg %p30
        $region26: #{encoder_forward.1} parent=23 // pred_check_branch
          %141 = sbr.rel (%p139) target = $region28
        $region27: #{encoder_forward.1} parent=23 // pred_region
          %p142 = scmp.lt.s32.totalorder %s10, 3
          %s143 = scalar_select %p142, %s10, 3
          %s144 = smul.addr %s143, 8
          %s145 = scalar_lea.vmem %s0, %s144
        $region28: #{encoder_forward.1} parent=23 // pred_fallthru
          _
      $region24: #{encoder_forward.1} parent=5 // pred_fallthru
        _
      %p146 = scmp.le.s32.totalorder 1, %s10
      %p147 = scmp.lt.s32.totalorder %s10, 5
      %p148 = pnand %p146, %p147
      %p149 = pneg %p148
      // Predicated region
      $region29: #{encoder_forward.1} parent=5 // pred_check
        _
      $region30: #{encoder_forward.1} parent=5 // pred_check_branch
        %151 = sbr.rel (%p148) target = $region32
      $region31: #{encoder_forward.1} parent=5 // pred_region
        %s152 = ssub.s32 %s10, 1
        // Predicated region
        $region33: #{encoder_forward.1} parent=31 // pred_check
          %p153 = pneg %p57
        $region34: #{encoder_forward.1} parent=31 // pred_check_branch
          %155 = sbr.rel (%p153) target = $region36
        $region35: #{encoder_forward.1} parent=31 // pred_region
          %156 = dma.done [#allocation3], 3712
        $region36: #{encoder_forward.1} parent=31 // pred_fallthru
          _
        %p157 = scmp.lt.s32.totalorder %s15, 3
        %s158 = scalar_select %p157, %s15, 3
        %s159 = smul.addr %s158, 8
        %s160 = scalar_lea.vmem %s0, %s159
        %p161 = pneg %p36
        %p162 = pneg %p33
        %p163 = pneg %p57
        %p164 = pneg %p54
        %p165 = pneg %p78
        %p166 = pneg %p75
        %p167 = pneg %p104
        %p168 = pneg %p101
        %p169 = scmp.lt.s32.totalorder %s15, 3
        %s170 = scalar_select %p169, %s15, 3
        %s171 = smul.addr %s170, 8
        %s172 = scalar_lea.vmem %s3, %s171
        %p173 = scmp.lt.s32.totalorder %s15, 3
        %s174 = scalar_select %p173, %s15, 3
        %s175 = smul.addr %s174, 8
        %s176 = scalar_lea.vmem %s0, %s175
        %p177 = scmp.lt.s32.totalorder %s15, 3
        %s178 = scalar_select %p177, %s15, 3
        %s179 = smul.addr %s178, 8
        %s180 = scalar_lea.vmem %s3, %s179
        %v181 = vld [vmem:[%s176] sm:$0xff]
        %v182 = vld [vmem:[%s2] sm:$0xff]
        %v183 = vld [vmem:[#allocation2] sm:$0xff]
        %vm184 = vcmask 64512
        %v186 = vsel %vm184, %v181, 0
        %188 = vmatprep.subr.mxu0 0.0
        %189 = vmatpush1.msra.mxu0 %v183
        %190 = vmatprep.subr.mxu0 0.0
        %191 = vmatpush1.msra.mxu0 0.0
        %192 = vmatprep.subr.mxu0 0.0
        %193 = vmatpush1.msra.mxu0 0.0
        %194 = vmatprep.subr.mxu0 0.0
        %195 = vmatpush1.msra.mxu0 0.0
        %196 = vmatprep.subr.mxu0 0.0
        %197 = vmatpush1.msra.mxu0 0.0
        %198 = vmatprep.subr.mxu0 0.0
        %199 = vmatpush1.msra.mxu0 0.0
        %200 = vmatprep.subr.mxu0 0.0
        %201 = vmatpush1.msra.mxu0 0.0
        %202 = vmatprep.subr.mxu0 0.0
        %203 = vmatpush1.msra.mxu0 0.0
        %204 = vmatprep.subr.mxu0 0.0
        %205 = vmatpush1.msra.mxu0 0.0
        %206 = vmatprep.subr.mxu0 0.0
        %207 = vmatpush1.msra.mxu0 0.0
        %208 = vmatprep.subr.mxu0 0.0
        %209 = vmatpush1.msra.mxu0 0.0
        %210 = vmatprep.subr.mxu0 0.0
        %211 = vmatpush1.msra.mxu0 0.0
        %212 = vmatprep.subr.mxu0 0.0
        %213 = vmatpush1.msra.mxu0 0.0
        %214 = vmatprep.subr.mxu0 0.0
        %215 = vmatpush1.msra.mxu0 0.0
        %216 = vmatprep.subr.mxu0 0.0
        %217 = vmatpush1.msra.mxu0 0.0
        %218 = vmatprep.subr.mxu0 0.0
        %219 = vmatpush1.msra.mxu0 0.0
        %220 = vmatprep.subr.mxu0 0.0
        %221 = vmatpush1.msra.mxu0 0.0
        %222 = vmatprep.subr.mxu0 0.0
        %223 = vmatpush1.msra.mxu0 0.0
        %224 = vmatprep.subr.mxu0 0.0
        %225 = vmatpush1.msra.mxu0 0.0
        %226 = vmatprep.subr.mxu0 0.0
        %227 = vmatpush1.msra.mxu0 0.0
        %228 = vmatprep.subr.mxu0 0.0
        %229 = vmatpush1.msra.mxu0 0.0
        %230 = vmatprep.subr.mxu0 0.0
        %231 = vmatpush1.msra.mxu0 0.0
        %232 = vmatprep.subr.mxu0 0.0
        %233 = vmatpush1.msra.mxu0 0.0
        %234 = vmatprep.subr.mxu0 0.0
        %235 = vmatpush1.msra.mxu0 0.0
        %236 = vmatprep.subr.mxu0 0.0
        %237 = vmatpush1.msra.mxu0 0.0
        %238 = vmatprep.subr.mxu0 0.0
        %239 = vmatpush1.msra.mxu0 0.0
        %240 = vmatprep.subr.mxu0 0.0
        %241 = vmatpush1.msra.mxu0 0.0
        %242 = vmatprep.subr.mxu0 0.0
        %243 = vmatpush1.msra.mxu0 0.0
        %244 = vmatprep.subr.mxu0 0.0
        %245 = vmatpush1.msra.mxu0 0.0
        %246 = vmatprep.subr.mxu0 0.0
        %247 = vmatpush1.msra.mxu0 0.0
        %248 = vmatprep.subr.mxu0 0.0
        %249 = vmatpush1.msra.mxu0 0.0
        %250 = vmatprep.subr.mxu0 0.0
        %251 = vmatpush1.msra.mxu0 0.0
        %252 = vmatprep.mubr.f32.mxu0 0.0
        %253 = vmatmul.mubr.f32.gmra.mrb[0].mxu0 %v186
        %v254 = vpop.f32.mrb[0].mxu0
        %v255 = vadd.f32 0.0, %v254
        %v256 = vpop.f32.mrb[0].mxu0
        %257 = vdwg.mxu0
        %vm258 = vcmask 261120
        %v259 = vsel %vm258, %v255, 0.0
        %v260 = vrot.slane %v259, 4
        %v261 = vadd.f32 %v259, %v260
        %v262 = vrot.slane %v261, 2
        %v263 = vadd.f32 %v261, %v262
        %v264 = vrot.slane %v263, 1
        %v265 = vadd.f32 %v263, %v264
        %v266 = vmul.f32 %v265, 0.125
        %v267 = vmul.f32 %v255, %v255
        %v268 = vsel %vm258, %v267, 0.0
        %v269 = vrot.slane %v268, 4
        %v270 = vadd.f32 %v268, %v269
        %v271 = vrot.slane %v270, 2
        %v272 = vadd.f32 %v270, %v271
        %v273 = vrot.slane %v272, 1
        %v274 = vadd.f32 %v272, %v273
        %v275 = vmul.f32 %v274, 0.125
        %v276 = vmul.f32 %v266, %v266
        %v277 = vsub.f32 %v275, %v276
        %v278 = vsub.f32 %v255, %v266
        %v279 = vadd.f32 %v277, 1e-05
        %v280 = vrsqrt.pop %v279
        %v281 = vmul.f32 %v278, %v280
        %v282 = vlaneseq
        %v283 = vshrl.u32 %v282, 7
        %v284 = vsub.s32 0, %v283
        %v285 = vrot.slane %v182, %v284
        %v286 = vmul.f32 %v281, %v285
        %v287 = vlaneseq
        %v288 = vshrl.u32 %v287, 7
        %v289 = vsub.s32 1, %v288
        %v290 = vrot.slane %v182, %v289
        %v291 = vadd.f32 %v286, %v290
        %v292 = vmul.f32 %v291, 0.01
        %v293 = vmax.f32 %v291, %v292
        %v294 = vld [vmem:[#allocation2 + $0x8] sm:$0xff]
        %v295 = vld [vmem:[#allocation2 + $0x10] sm:$0xff]
        %v296 = vld [vmem:[#allocation2 + $0x18] sm:$0xff]
        %v297 = vld [vmem:[#allocation2 + $0x20] sm:$0xff]
        %v299 = vsel %vm258, %v293, 0
        %301 = vmatprep.subr.mxu0 0.0
        %302 = vmatpush1.msra.mxu0 %v294
        %303 = vmatprep.subr.mxu0 0.0
        %304 = vmatpush1.msra.mxu0 %v295
        %305 = vmatprep.subr.mxu0 0.0
        %306 = vmatpush1.msra.mxu0 %v296
        %307 = vmatprep.subr.mxu0 0.0
        %308 = vmatpush1.msra.mxu0 %v297
        %309 = vmatprep.subr.mxu0 0.0
        %310 = vmatpush1.msra.mxu0 0.0
        %311 = vmatprep.subr.mxu0 0.0
        %312 = vmatpush1.msra.mxu0 0.0
        %313 = vmatprep.subr.mxu0 0.0
        %314 = vmatpush1.msra.mxu0 0.0
        %315 = vmatprep.subr.mxu0 0.0
        %316 = vmatpush1.msra.mxu0 0.0
        %317 = vmatprep.subr.mxu0 0.0
        %318 = vmatpush1.msra.mxu0 0.0
        %319 = vmatprep.subr.mxu0 0.0
        %320 = vmatpush1.msra.mxu0 0.0
        %321 = vmatprep.subr.mxu0 0.0
        %322 = vmatpush1.msra.mxu0 0.0
        %323 = vmatprep.subr.mxu0 0.0
        %324 = vmatpush1.msra.mxu0 0.0
        %325 = vmatprep.subr.mxu0 0.0
        %326 = vmatpush1.msra.mxu0 0.0
        %327 = vmatprep.subr.mxu0 0.0
        %328 = vmatpush1.msra.mxu0 0.0
        %329 = vmatprep.subr.mxu0 0.0
        %330 = vmatpush1.msra.mxu0 0.0
        %331 = vmatprep.subr.mxu0 0.0
        %332 = vmatpush1.msra.mxu0 0.0
        %333 = vmatprep.subr.mxu0 0.0
        %334 = vmatpush1.msra.mxu0 0.0
        %335 = vmatprep.subr.mxu0 0.0
        %336 = vmatpush1.msra.mxu0 0.0
        %337 = vmatprep.subr.mxu0 0.0
        %338 = vmatpush1.msra.mxu0 0.0
        %339 = vmatprep.subr.mxu0 0.0
        %340 = vmatpush1.msra.mxu0 0.0
        %341 = vmatprep.subr.mxu0 0.0
        %342 = vmatpush1.msra.mxu0 0.0
        %343 = vmatprep.subr.mxu0 0.0
        %344 = vmatpush1.msra.mxu0 0.0
        %345 = vmatprep.subr.mxu0 0.0
        %346 = vmatpush1.msra.mxu0 0.0
        %347 = vmatprep.subr.mxu0 0.0
        %348 = vmatpush1.msra.mxu0 0.0
        %349 = vmatprep.subr.mxu0 0.0
        %350 = vmatpush1.msra.mxu0 0.0
        %351 = vmatprep.subr.mxu0 0.0
        %352 = vmatpush1.msra.mxu0 0.0
        %353 = vmatprep.subr.mxu0 0.0
        %354 = vmatpush1.msra.mxu0 0.0
        %355 = vmatprep.subr.mxu0 0.0
        %356 = vmatpush1.msra.mxu0 0.0
        %357 = vmatprep.subr.mxu0 0.0
        %358 = vmatpush1.msra.mxu0 0.0
        %359 = vmatprep.subr.mxu0 0.0
        %360 = vmatpush1.msra.mxu0 0.0
        %361 = vmatprep.subr.mxu0 0.0
        %362 = vmatpush1.msra.mxu0 0.0
        %363 = vmatprep.subr.mxu0 0.0
        %364 = vmatpush1.msra.mxu0 0.0
        %365 = vmatprep.mubr.f32.mxu0 0.0
        %366 = vmatmul.mubr.f32.gmra.mrb[0].mxu0 %v299
        %v367 = vpop.f32.mrb[0].mxu0
        %v368 = vadd.f32 0.0, %v367
        %v369 = vpop.f32.mrb[0].mxu0
        %370 = vdwg.mxu0
        %vm371 = vcmask 523264
        %v372 = vsel %vm371, %v368, 0.0
        %v373 = vrot.slane %v372, 4
        %v374 = vadd.f32 %v372, %v373
        %v375 = vrot.slane %v374, 2
        %v376 = vadd.f32 %v374, %v375
        %v377 = vrot.slane %v376, 1
        %v378 = vadd.f32 %v376, %v377
        %v379 = vmul.f32 %v378, 0.125
        %v380 = vmul.f32 %v368, %v368
        %v381 = vsel %vm371, %v380, 0.0
        %v382 = vrot.slane %v381, 4
        %v383 = vadd.f32 %v381, %v382
        %v384 = vrot.slane %v383, 2
        %v385 = vadd.f32 %v383, %v384
        %v386 = vrot.slane %v385, 1
        %v387 = vadd.f32 %v385, %v386
        %v388 = vmul.f32 %v387, 0.125
        %v389 = vmul.f32 %v379, %v379
        %v390 = vsub.f32 %v388, %v389
        %v391 = vsub.f32 %v368, %v379
        %v392 = vadd.f32 %v390, 1e-05
        %v393 = vrsqrt.pop %v392
        %v394 = vmul.f32 %v391, %v393
        %v395 = vlaneseq
        %v396 = vshrl.u32 %v395, 7
        %v397 = vsub.s32 2, %v396
        %v398 = vrot.slane %v182, %v397
        %v399 = vmul.f32 %v394, %v398
        %v400 = vlaneseq
        %v401 = vshrl.u32 %v400, 7
        %v402 = vsub.s32 3, %v401
        %v403 = vrot.slane %v182, %v402
        %v404 = vadd.f32 %v399, %v403
        %v405 = vmul.f32 %v404, 0.01
        %v406 = vmax.f32 %v404, %v405
        %v407 = vld [vmem:[#allocation2 + $0x28] sm:$0xff]
        %v408 = vld [vmem:[#allocation2 + $0x30] sm:$0xff]
        %v409 = vld [vmem:[#allocation2 + $0x38] sm:$0xff]
        %v410 = vld [vmem:[#allocation2 + $0x40] sm:$0xff]
        %v411 = vld [vmem:[#allocation2 + $0x48] sm:$0xff]
        %v412 = vld [vmem:[#allocation2 + $0x50] sm:$0xff]
        %v413 = vld [vmem:[#allocation2 + $0x58] sm:$0xff]
        %v414 = vld [vmem:[#allocation2 + $0x60] sm:$0xff]
        %v416 = vsel %vm371, %v406, 0
        %418 = vmatprep.subr.mxu0 0.0
        %419 = vmatpush1.msra.mxu0 %v407
        %420 = vmatprep.subr.mxu0 0.0
        %421 = vmatpush1.msra.mxu0 %v408
        %422 = vmatprep.subr.mxu0 0.0
        %423 = vmatpush1.msra.mxu0 %v409
        %424 = vmatprep.subr.mxu0 0.0
        %425 = vmatpush1.msra.mxu0 %v410
        %426 = vmatprep.subr.mxu0 0.0
        %427 = vmatpush1.msra.mxu0 %v411
        %428 = vmatprep.subr.mxu0 0.0
        %429 = vmatpush1.msra.mxu0 %v412
        %430 = vmatprep.subr.mxu0 0.0
        %431 = vmatpush1.msra.mxu0 %v413
        %432 = vmatprep.subr.mxu0 0.0
        %433 = vmatpush1.msra.mxu0 %v414
        %434 = vmatprep.subr.mxu0 0.0
        %435 = vmatpush1.msra.mxu0 0.0
        %436 = vmatprep.subr.mxu0 0.0
        %437 = vmatpush1.msra.mxu0 0.0
        %438 = vmatprep.subr.mxu0 0.0
        %439 = vmatpush1.msra.mxu0 0.0
        %440 = vmatprep.subr.mxu0 0.0
        %441 = vmatpush1.msra.mxu0 0.0
        %442 = vmatprep.subr.mxu0 0.0
        %443 = vmatpush1.msra.mxu0 0.0
        %444 = vmatprep.subr.mxu0 0.0
        %445 = vmatpush1.msra.mxu0 0.0
        %446 = vmatprep.subr.mxu0 0.0
        %447 = vmatpush1.msra.mxu0 0.0
        %448 = vmatprep.subr.mxu0 0.0
        %449 = vmatpush1.msra.mxu0 0.0
        %450 = vmatprep.subr.mxu0 0.0
        %451 = vmatpush1.msra.mxu0 0.0
        %452 = vmatprep.subr.mxu0 0.0
        %453 = vmatpush1.msra.mxu0 0.0
        %454 = vmatprep.subr.mxu0 0.0
        %455 = vmatpush1.msra.mxu0 0.0
        %456 = vmatprep.subr.mxu0 0.0
        %457 = vmatpush1.msra.mxu0 0.0
        %458 = vmatprep.subr.mxu0 0.0
        %459 = vmatpush1.msra.mxu0 0.0
        %460 = vmatprep.subr.mxu0 0.0
        %461 = vmatpush1.msra.mxu0 0.0
        %462 = vmatprep.subr.mxu0 0.0
        %463 = vmatpush1.msra.mxu0 0.0
        %464 = vmatprep.subr.mxu0 0.0
        %465 = vmatpush1.msra.mxu0 0.0
        %466 = vmatprep.subr.mxu0 0.0
        %467 = vmatpush1.msra.mxu0 0.0
        %468 = vmatprep.subr.mxu0 0.0
        %469 = vmatpush1.msra.mxu0 0.0
        %470 = vmatprep.subr.mxu0 0.0
        %471 = vmatpush1.msra.mxu0 0.0
        %472 = vmatprep.subr.mxu0 0.0
        %473 = vmatpush1.msra.mxu0 0.0
        %474 = vmatprep.subr.mxu0 0.0
        %475 = vmatpush1.msra.mxu0 0.0
        %476 = vmatprep.subr.mxu0 0.0
        %477 = vmatpush1.msra.mxu0 0.0
        %478 = vmatprep.subr.mxu0 0.0
        %479 = vmatpush1.msra.mxu0 0.0
        %480 = vmatprep.subr.mxu0 0.0
        %481 = vmatpush1.msra.mxu0 0.0
        %482 = vmatprep.mubr.f32.mxu0 0.0
        %483 = vmatmul.mubr.f32.gmra.mrb[0].mxu0 %v416
        %v484 = vpop.f32.mrb[0].mxu0
        %v485 = vadd.f32 0.0, %v484
        %v486 = vpop.f32.mrb[0].mxu0
        %487 = vdwg.mxu0
        %v488 = vrot.slane %v485, 4
        %v489 = vadd.f32 %v485, %v488
        %v490 = vrot.slane %v489, 2
        %v491 = vadd.f32 %v489, %v490
        %v492 = vrot.slane %v491, 1
        %v493 = vadd.f32 %v491, %v492
        %v494 = vmul.f32 %v493, 0.125
        %v495 = vmul.f32 %v485, %v485
        %v496 = vrot.slane %v495, 4
        %v497 = vadd.f32 %v495, %v496
        %v498 = vrot.slane %v497, 2
        %v499 = vadd.f32 %v497, %v498
        %v500 = vrot.slane %v499, 1
        %v501 = vadd.f32 %v499, %v500
        %v502 = vmul.f32 %v501, 0.125
        %v503 = vmul.f32 %v494, %v494
        %v504 = vsub.f32 %v502, %v503
        %v505 = vsub.f32 %v485, %v494
        %v506 = vadd.f32 %v504, 1e-05
        %v507 = vrsqrt.pop %v506
        %v508 = vmul.f32 %v505, %v507
        %v509 = vlaneseq
        %v510 = vshrl.u32 %v509, 7
        %v511 = vsub.s32 4, %v510
        %v512 = vrot.slane %v182, %v511
        %v513 = vmul.f32 %v508, %v512
        %v514 = vlaneseq
        %v515 = vshrl.u32 %v514, 7
        %v516 = vsub.s32 5, %v515
        %v517 = vrot.slane %v182, %v516
        %v518 = vadd.f32 %v513, %v517
        %v519 = vmul.f32 %v518, 0.01
        %v520 = vmax.f32 %v518, %v519
        %v521 = vld [vmem:[#allocation2 + $0x68] sm:$0xff]
        %v522 = vld [vmem:[#allocation2 + $0x70] sm:$0xff]
        %v523 = vld [vmem:[#allocation2 + $0x78] sm:$0xff]
        %v524 = vld [vmem:[#allocation2 + $0x80] sm:$0xff]
        %v525 = vld [vmem:[#allocation2 + $0x88] sm:$0xff]
        %v526 = vld [vmem:[#allocation2 + $0x90] sm:$0xff]
        %v527 = vld [vmem:[#allocation2 + $0x98] sm:$0xff]
        %v528 = vld [vmem:[#allocation2 + $0xa0] sm:$0xff]
        %v529 = vld [vmem:[#allocation2 + $0xa8] sm:$0xff]
        %v530 = vld [vmem:[#allocation2 + $0xb0] sm:$0xff]
        %v531 = vld [vmem:[#allocation2 + $0xb8] sm:$0xff]
        %v532 = vld [vmem:[#allocation2 + $0xc0] sm:$0xff]
        %v533 = vld [vmem:[#allocation2 + $0xc8] sm:$0xff]
        %v534 = vld [vmem:[#allocation2 + $0xd0] sm:$0xff]
        %v535 = vld [vmem:[#allocation2 + $0xd8] sm:$0xff]
        %v536 = vld [vmem:[#allocation2 + $0xe0] sm:$0xff]
        %v537 = vlaneseq
        %v538 = vshrl.u32 %v537, 7
        %v539 = vsub.s32 6, %v538
        %v540 = vrot.slane %v182, %v539
        %541 = vmatprep.subr.mxu0 0.0
        %542 = vmatpush1.msra.mxu0 %v521
        %543 = vmatprep.subr.mxu0 0.0
        %544 = vmatpush1.msra.mxu0 %v522
        %545 = vmatprep.subr.mxu0 0.0
        %546 = vmatpush1.msra.mxu0 %v523
        %547 = vmatprep.subr.mxu0 0.0
        %548 = vmatpush1.msra.mxu0 %v524
        %549 = vmatprep.subr.mxu0 0.0
        %550 = vmatpush1.msra.mxu0 %v525
        %551 = vmatprep.subr.mxu0 0.0
        %552 = vmatpush1.msra.mxu0 %v526
        %553 = vmatprep.subr.mxu0 0.0
        %554 = vmatpush1.msra.mxu0 %v527
        %555 = vmatprep.subr.mxu0 0.0
        %556 = vmatpush1.msra.mxu0 %v528
        %557 = vmatprep.subr.mxu0 0.0
        %558 = vmatpush1.msra.mxu0 %v529
        %559 = vmatprep.subr.mxu0 0.0
        %560 = vmatpush1.msra.mxu0 %v530
        %561 = vmatprep.subr.mxu0 0.0
        %562 = vmatpush1.msra.mxu0 %v531
        %563 = vmatprep.subr.mxu0 0.0
        %564 = vmatpush1.msra.mxu0 %v532
        %565 = vmatprep.subr.mxu0 0.0
        %566 = vmatpush1.msra.mxu0 %v533
        %567 = vmatprep.subr.mxu0 0.0
        %568 = vmatpush1.msra.mxu0 %v534
        %569 = vmatprep.subr.mxu0 0.0
        %570 = vmatpush1.msra.mxu0 %v535
        %571 = vmatprep.subr.mxu0 0.0
        %572 = vmatpush1.msra.mxu0 %v536
        %573 = vmatprep.subr.mxu0 0.0
        %574 = vmatpush1.msra.mxu0 0.0
        %575 = vmatprep.subr.mxu0 0.0
        %576 = vmatpush1.msra.mxu0 0.0
        %577 = vmatprep.subr.mxu0 0.0
        %578 = vmatpush1.msra.mxu0 0.0
        %579 = vmatprep.subr.mxu0 0.0
        %580 = vmatpush1.msra.mxu0 0.0
        %581 = vmatprep.subr.mxu0 0.0
        %582 = vmatpush1.msra.mxu0 0.0
        %583 = vmatprep.subr.mxu0 0.0
        %584 = vmatpush1.msra.mxu0 0.0
        %585 = vmatprep.subr.mxu0 0.0
        %586 = vmatpush1.msra.mxu0 0.0
        %587 = vmatprep.subr.mxu0 0.0
        %588 = vmatpush1.msra.mxu0 0.0
        %589 = vmatprep.subr.mxu0 0.0
        %590 = vmatpush1.msra.mxu0 0.0
        %591 = vmatprep.subr.mxu0 0.0
        %592 = vmatpush1.msra.mxu0 0.0
        %593 = vmatprep.subr.mxu0 0.0
        %594 = vmatpush1.msra.mxu0 0.0
        %595 = vmatprep.subr.mxu0 0.0
        %596 = vmatpush1.msra.mxu0 0.0
        %597 = vmatprep.subr.mxu0 0.0
        %598 = vmatpush1.msra.mxu0 0.0
        %599 = vmatprep.subr.mxu0 0.0
        %600 = vmatpush1.msra.mxu0 0.0
        %601 = vmatprep.subr.mxu0 0.0
        %602 = vmatpush1.msra.mxu0 0.0
        %603 = vmatprep.subr.mxu0 0.0
        %604 = vmatpush1.msra.mxu0 0.0
        %605 = vmatprep.mubr.f32.mxu0 0.0
        %606 = vmatmul.mubr.f32.gmra.mrb[0].mxu0 %v520
        %v607 = vpop.f32.mrb[0].mxu0
        %v608 = vadd.f32 %v540, %v607
        %v609 = vpop.f32.mrb[0].mxu0
        %610 = vdwg.mxu0
        %v611 = vmul.f32 %v608, 0.5
        %v612 = vmul.f32 %v611, 1.442695
        %v613 = vpow.pop %v612
        %615 = vrot.lane.b32.xlu0 %v613, 4
        %v616 = vpop.permute.xlu0 %615
        %v618 = vmul.f32 %v181, %v616
        %620 = vrot.lane.b32.xlu0 %v608, 8
        %v621 = vpop.permute.xlu0 %620
        %v623 = vadd.f32 %v618, %v621
        %625 = vrot.lane.b32.xlu0 %v623, 120
        %v626 = vpop.permute.xlu0 %625
        %628 = vrot.lane.b32.xlu0 %v608, 4
        %v629 = vpop.permute.xlu0 %628
        %vm631 = vcmask 31744
        %v632 = vsel %vm631, %v626, %v629
        %v633 = vsel %vm184, %v632, %v616
        %vm634 = vcmask 97280
        %v635 = vsel %vm634, %v633, 0.0
        %636 = vst [vmem:[%s180] sm:$0xff] %v635
        %p637 = scmp.lt.s32.totalorder %s15, 3
        %s638 = scalar_select %p637, %s15, 3
        %s639 = smul.addr %s638, 8
        %s640 = scalar_lea.vmem %s3, %s639
        // Predicated region
        $region37: #{encoder_forward.1} parent=31 // pred_check
          %p641 = pneg %p101
        $region38: #{encoder_forward.1} parent=31 // pred_check_branch
          %643 = sbr.rel (%p641) target = $region40
        $region39: #{encoder_forward.1} parent=31 // pred_region
          _
        $region40: #{encoder_forward.1} parent=31 // pred_fallthru
          _
      $region32: #{encoder_forward.1} parent=5 // pred_fallthru
        _
      %p644 = scmp.le.s32.totalorder 2, %s10
      // Predicated region
      $region41: #{encoder_forward.1} parent=5 // pred_check
        %p645 = pneg %p644
      $region42: #{encoder_forward.1} parent=5 // pred_check_branch
        %647 = sbr.rel (%p645) target = $region44
      $region43: #{encoder_forward.1} parent=5 // pred_region
        %s648 = ssub.s32 %s10, 2
        // Predicated region
        $region45: #{encoder_forward.1} parent=43 // pred_check
          %p649 = pneg %p107
        $region46: #{encoder_forward.1} parent=43 // pred_check_branch
          %651 = sbr.rel (%p649) target = $region48
        $region47: #{encoder_forward.1} parent=43 // pred_region
          %p652 = scmp.lt.s32.totalorder %s16, 3
          %s653 = scalar_select %p652, %s16, 3
          %s654 = smul.addr %s653, 8
          %s655 = scalar_lea.vmem %s3, %s654
        $region48: #{encoder_forward.1} parent=43 // pred_fallthru
          _
      $region44: #{encoder_forward.1} parent=5 // pred_fallthru
        _
    $region6: #{encoder_forward.1} parent=1 // loop_footer
      %s14 = sadd.s32 1, %s10
    $region7: #{encoder_forward.1} parent=1 // loop_footer_branch
      %9 = sbr.rel target = $region3
    $region8: #{encoder_forward.1} parent=1 // loop_exit
      _
    %656 = vsyncpa [#allocation3], 1
    %s657 = scalar_lea.sflag [#allocation3], 1
    %658 = vsyncpa %s657, 1

</llo_original>
